<compile_context>
chip_gen: v5e
topology: v5e:2x2
jax: 0.10.0
libtpu: 0.0.40
codegen_flags: <defaults>
</compile_context>

<pallas_src>
import functools

import jax
import jax.numpy as jnp
from jax.experimental import pallas as pl
from jax.experimental.pallas import tpu as pltpu


# ----------------------------------------------------------------------------
# Fused kernel: 9 x (pltpu.roll + mask + accumulating matmul) -> ReLU -> concat
# ----------------------------------------------------------------------------
def _dense_block_kernel(x_ref, w_ref, b_ref, o_ref, *, H, W):
    # x_ref: (Nb, Cin, H*W)       Nb images, channel-major, pixels on lanes
    # w_ref: (9, Cout, Cin)       3x3 weights, tap-major (ky*3 + kx)
    # b_ref: (Cout, 1)
    # o_ref: (Nb, Cin+Cout, H*W)  fused [x ; relu(conv3x3(x) + b)]
    Nb, Cin, HW = x_ref.shape
    Cout = w_ref.shape[1]
    out_dtype = o_ref.dtype

    # ---- boundary masks: hoisted, (1, HW), shared by all images & taps ----
    # Row validity of a +/-1 vertical shift is a pure range test on the flat
    # pixel index (no integer divide); only the column test needs `% W`.
    flat = jax.lax.broadcasted_iota(jnp.int32, (1, HW), 1)
    colv = flat % W
    row_ok = {-1: flat >= W, 0: None, 1: flat < (H - 1) * W}
    col_ok = {-1: colv >= 1, 0: None, 1: colv < (W - 1)}

    # Bias folded into the accumulator init (broadcast hoisted out of loops).
    bias = jnp.broadcast_to(b_ref[...].astype(jnp.float32), (Cout, HW))

    for i in range(Nb):                      # static unroll, Nb is small
        xi = x_ref[i]                        # (Cin, HW)
        acc = bias
        for ky in range(3):
            dy = ky - 1
            for kx in range(3):
                dx = kx - 1
                d = dy * W + dx              # flat-pixel offset of this tap
                if d == 0:
                    tap = xi
                else:
                    # output[p] must see x[p + d] == cyclic roll left by d.
                    # Non-negative static shift; XLU rotate, not slice+concat.
                    tap = pltpu.roll(xi, shift=(-d) % HW, axis=1)
                masks = [m for m in (row_ok[dy], col_ok[dx]) if m is not None]
                if masks:
                    valid = masks[0] & masks[1] if len(masks) == 2 else masks[0]
                    tap = jnp.where(valid, tap, 0.0).astype(xi.dtype)
                # Small accumulating MXU matmul with f32 accumulation.
                acc = acc + jnp.dot(w_ref[ky * 3 + kx], tap,
                                    preferred_element_type=jnp.float32)
        # Fused channel concat via two direct slice stores (no concat temp).
        o_ref[i, :Cin, :] = xi.astype(out_dtype)
        o_ref[i, Cin:, :] = jnp.maximum(acc, 0.0).astype(out_dtype)


# ----------------------------------------------------------------------------
# Wrapper: NCHW in / NCHW out, weights in PyTorch OIHW layout.
# ----------------------------------------------------------------------------
def dense_block_forward(x_nchw, w_oihw, b, *, images_per_step=None):
    N, Cin, H, W = x_nchw.shape
    Cout = w_oihw.shape[0]
    Ctot = Cin + Cout
    HW = H * W

    if images_per_step is None:
        # Amortise per-grid-step overhead, but keep >= 2 "parallel" steps so
        # both v7x TensorCores get work (v5e/v6e single-TC are unaffected).
        images_per_step = N // 2 if (N >= 4 and N % 2 == 0) else 1
    Nb = images_per_step
    if N % Nb:
        raise ValueError(f"images_per_step={Nb} must divide batch {N}")

    # Free metadata reshape (contiguous): pixels onto the lane axis.
    x_flat = x_nchw.reshape(N, Cin, HW)
    # Pack OIHW weights tap-major: w3d[ky*3 + kx] == w_oihw[:, :, ky, kx].
    w3d = jnp.transpose(w_oihw, (2, 3, 0, 1)).reshape(9, Cout, Cin)
    b2d = b.reshape(Cout, 1)

    kernel = functools.partial(_dense_block_kernel, H=H, W=W)

    out_flat = pl.pallas_call(
        kernel,
        out_shape=jax.ShapeDtypeStruct((N, Ctot, HW), x_nchw.dtype),
        grid=(N // Nb,),
        in_specs=[
            pl.BlockSpec((Nb, Cin, HW), lambda n: (n, 0, 0)),
            pl.BlockSpec((9, Cout, Cin), lambda n: (0, 0, 0)),  # VMEM-resident
            pl.BlockSpec((Cout, 1), lambda n: (0, 0)),
        ],
        out_specs=pl.BlockSpec((Nb, Ctot, HW), lambda n: (n, 0, 0)),
        compiler_params=pltpu.CompilerParams(
            dimension_semantics=("parallel",)),
    )(x_flat, w3d, b2d)

    return out_flat.reshape(N, Ctot, H, W)


# ----------------------------------------------------------------------------
# Pure-JAX reference mirroring the PyTorch module exactly (NCHW / OIHW).
# ----------------------------------------------------------------------------
def dense_block_ref(x_nchw, w_oihw, b):
    y = jax.lax.conv_general_dilated(
        x_nchw, w_oihw, window_strides=(1, 1), padding=((1, 1), (1, 1)),
        dimension_numbers=("NCHW", "OIHW", "NCHW"))
    y = jnp.maximum(y + b[None, :, None, None], 0.0)
    return jnp.concatenate([x_nchw, y], axis=1)


if __name__ == "__main__":
    N, Cin, H, W = 2, 4, 16, 16
    Cadd = 8                                    # addition_channels

    key = jax.random.PRNGKey(0)
    k_x, k_w, k_b = jax.random.split(key, 3)
    x = jax.random.normal(k_x, (N, Cin, H, W), jnp.float32)
    w = 0.1 * jax.random.normal(k_w, (Cadd, Cin, 3, 3), jnp.float32)   # OIHW
    b = 0.05 * jax.random.normal(k_b, (Cadd,), jnp.float32)

    out = dense_block_forward(x, w, b)
    out = jax.block_until_ready(out)

    ref = dense_block_ref(x, w, b)
    assert out.shape == (N, Cin + Cadd, H, W)
    err = jnp.max(jnp.abs(out - ref))
    assert jnp.allclose(out, ref, atol=1e-4, rtol=1e-4), f"max abs err = {err}"

    print("KERNEL_OK")
</pallas_src>

<mosaic_0001>
module attributes {stable_mosaic.version = 11 : i64} {
  func.func @_dense_block_kernel(%arg0: i32, %arg1: memref<1x4x256xf32, #tpu.memory_space<vmem>>, %arg2: memref<9x8x4xf32, #tpu.memory_space<vmem>>, %arg3: memref<8x1xf32, #tpu.memory_space<vmem>>, %arg4: memref<1x12x256xf32, #tpu.memory_space<vmem>>) attributes {dimension_semantics = [#tpu.dimension_semantics<parallel>], iteration_bounds = array<i64: 2>, scalar_prefetch = 0 : i64, scratch_operands = 0 : i64, tpu.core_type = #tpu.core_type<tc>, window_params = [{transform_indices = @transform_0, window_bounds = array<i64: 1, 4, 256>}, {pipeline_mode = #tpu.pipeline_mode<synchronous>, transform_indices = @transform_1, window_bounds = array<i64: 9, 8, 4>}, {pipeline_mode = #tpu.pipeline_mode<synchronous>, transform_indices = @transform_2, window_bounds = array<i64: 8, 1>}, {transform_indices = @transform_3, window_bounds = array<i64: 1, 12, 256>}]} {
    %0 = tpu.iota {dimensions = array<i32: 1>} : vector<1x256xi32>
    %c16_i32 = arith.constant 16 : i32
    %c0_i32 = arith.constant 0 : i32
    %1 = arith.cmpi eq, %c16_i32, %c0_i32 : i32
    %c1_i32 = arith.constant 1 : i32
    %2 = arith.select %1, %c1_i32, %c16_i32 : i32
    %3 = vector.broadcast %2 : i32 to vector<1x256xi32>
    %4 = arith.remsi %0, %3 : vector<1x256xi32>
    %c0_i32_0 = arith.constant 0 : i32
    %5 = vector.broadcast %c0_i32_0 : i32 to vector<1x256xi32>
    %6 = arith.cmpi ne, %4, %5 : vector<1x256xi32>
    %c0_i32_1 = arith.constant 0 : i32
    %7 = vector.broadcast %c0_i32_1 : i32 to vector<1x256xi32>
    %8 = arith.cmpi slt, %4, %7 : vector<1x256xi32>
    %c0_i32_2 = arith.constant 0 : i32
    %9 = arith.cmpi slt, %2, %c0_i32_2 : i32
    %10 = vector.broadcast %9 : i1 to vector<1x256xi1>
    %11 = vector.broadcast %10 : vector<1x256xi1> to vector<1x256xi1>
    %12 = arith.xori %8, %11 : vector<1x256xi1>
    %13 = arith.andi %12, %6 : vector<1x256xi1>
    %14 = vector.broadcast %2 : i32 to vector<1x256xi32>
    %15 = arith.addi %4, %14 : vector<1x256xi32>
    %16 = arith.select %13, %15, %4 : vector<1x256xi1>, vector<1x256xi32>
    %c16_i32_3 = arith.constant 16 : i32
    %17 = vector.broadcast %c16_i32_3 : i32 to vector<1x256xi32>
    %18 = arith.cmpi sge, %0, %17 : vector<1x256xi32>
    %c240_i32 = arith.constant 240 : i32
    %19 = vector.broadcast %c240_i32 : i32 to vector<1x256xi32>
    %20 = arith.cmpi slt, %0, %19 : vector<1x256xi32>
    %c1_i32_4 = arith.constant 1 : i32
    %21 = vector.broadcast %c1_i32_4 : i32 to vector<1x256xi32>
    %22 = arith.cmpi sge, %16, %21 : vector<1x256xi32>
    %c15_i32 = arith.constant 15 : i32
    %23 = vector.broadcast %c15_i32 : i32 to vector<1x256xi32>
    %24 = arith.cmpi slt, %16, %23 : vector<1x256xi32>
    %c0 = arith.constant 0 : index
    %c0_5 = arith.constant 0 : index
    %25 = vector.load %arg3[%c0, %c0_5] : memref<8x1xf32, #tpu.memory_space<vmem>>, vector<8x1xf32>
    %26 = vector.shape_cast %25 : vector<8x1xf32> to vector<8x1xf32>
    %27 = vector.broadcast %26 : vector<8x1xf32> to vector<8x256xf32>
    %c0_6 = arith.constant 0 : index
    %c0_7 = arith.constant 0 : index
    %c0_8 = arith.constant 0 : index
    %28 = vector.load %arg1[%c0_6, %c0_7, %c0_8] : memref<1x4x256xf32, #tpu.memory_space<vmem>>, vector<1x4x256xf32>
    %29 = vector.shape_cast %28 : vector<1x4x256xf32> to vector<4x256xf32>
    %c17_i32 = arith.constant 17 : i32
    %30 = tpu.dynamic_rotate %29 by %c17_i32 dim 1 : vector<4x256xf32>, i32 -> vector<4x256xf32>
    %31 = arith.andi %18, %22 : vector<1x256xi1>
    %cst = arith.constant 0.000000e+00 : f32
    %32 = vector.shape_cast %31 : vector<1x256xi1> to vector<1x256xi1>
    %33 = vector.broadcast %32 : vector<1x256xi1> to vector<4x256xi1>
    %34 = vector.broadcast %cst : f32 to vector<4x256xf32>
    %35 = arith.select %33, %30, %34 : vector<4x256xi1>, vector<4x256xf32>
    %c0_9 = arith.constant 0 : index
    %c0_10 = arith.constant 0 : index
    %c0_11 = arith.constant 0 : index
    %36 = vector.load %arg2[%c0_9, %c0_10, %c0_11] : memref<9x8x4xf32, #tpu.memory_space<vmem>>, vector<1x8x4xf32>
    %37 = vector.shape_cast %36 : vector<1x8x4xf32> to vector<8x4xf32>
    %cst_12 = arith.constant dense<0.000000e+00> : vector<8x256xf32>
    %38 = tpu.matmul %37, %35, %cst_12 {dimension_numbers = #tpu.dot_dimension_numbers<[1], [0], [0], [1], [0, 0, 1, 1], [], []>} : vector<8x4xf32>, vector<4x256xf32>, vector<8x256xf32> -> vector<8x256xf32>
    %39 = arith.addf %27, %38 : vector<8x256xf32>
    %c16_i32_13 = arith.constant 16 : i32
    %40 = tpu.dynamic_rotate %29 by %c16_i32_13 dim 1 : vector<4x256xf32>, i32 -> vector<4x256xf32>
    %cst_14 = arith.constant 0.000000e+00 : f32
    %41 = vector.shape_cast %18 : vector<1x256xi1> to vector<1x256xi1>
    %42 = vector.broadcast %41 : vector<1x256xi1> to vector<4x256xi1>
    %43 = vector.broadcast %cst_14 : f32 to vector<4x256xf32>
    %44 = arith.select %42, %40, %43 : vector<4x256xi1>, vector<4x256xf32>
    %c1 = arith.constant 1 : index
    %c0_15 = arith.constant 0 : index
    %c0_16 = arith.constant 0 : index
    %45 = vector.load %arg2[%c1, %c0_15, %c0_16] : memref<9x8x4xf32, #tpu.memory_space<vmem>>, vector<1x8x4xf32>
    %46 = vector.shape_cast %45 : vector<1x8x4xf32> to vector<8x4xf32>
    %cst_17 = arith.constant dense<0.000000e+00> : vector<8x256xf32>
    %47 = tpu.matmul %46, %44, %cst_17 {dimension_numbers = #tpu.dot_dimension_numbers<[1], [0], [0], [1], [0, 0, 1, 1], [], []>} : vector<8x4xf32>, vector<4x256xf32>, vector<8x256xf32> -> vector<8x256xf32>
    %48 = arith.addf %39, %47 : vector<8x256xf32>
    %c15_i32_18 = arith.constant 15 : i32
    %49 = tpu.dynamic_rotate %29 by %c15_i32_18 dim 1 : vector<4x256xf32>, i32 -> vector<4x256xf32>
    %50 = arith.andi %18, %24 : vector<1x256xi1>
    %cst_19 = arith.constant 0.000000e+00 : f32
    %51 = vector.shape_cast %50 : vector<1x256xi1> to vector<1x256xi1>
    %52 = vector.broadcast %51 : vector<1x256xi1> to vector<4x256xi1>
    %53 = vector.broadcast %cst_19 : f32 to vector<4x256xf32>
    %54 = arith.select %52, %49, %53 : vector<4x256xi1>, vector<4x256xf32>
    %c2 = arith.constant 2 : index
    %c0_20 = arith.constant 0 : index
    %c0_21 = arith.constant 0 : index
    %55 = vector.load %arg2[%c2, %c0_20, %c0_21] : memref<9x8x4xf32, #tpu.memory_space<vmem>>, vector<1x8x4xf32>
    %56 = vector.shape_cast %55 : vector<1x8x4xf32> to vector<8x4xf32>
    %cst_22 = arith.constant dense<0.000000e+00> : vector<8x256xf32>
    %57 = tpu.matmul %56, %54, %cst_22 {dimension_numbers = #tpu.dot_dimension_numbers<[1], [0], [0], [1], [0, 0, 1, 1], [], []>} : vector<8x4xf32>, vector<4x256xf32>, vector<8x256xf32> -> vector<8x256xf32>
    %58 = arith.addf %48, %57 : vector<8x256xf32>
    %c1_i32_23 = arith.constant 1 : i32
    %59 = tpu.dynamic_rotate %29 by %c1_i32_23 dim 1 : vector<4x256xf32>, i32 -> vector<4x256xf32>
    %cst_24 = arith.constant 0.000000e+00 : f32
    %60 = vector.shape_cast %22 : vector<1x256xi1> to vector<1x256xi1>
    %61 = vector.broadcast %60 : vector<1x256xi1> to vector<4x256xi1>
    %62 = vector.broadcast %cst_24 : f32 to vector<4x256xf32>
    %63 = arith.select %61, %59, %62 : vector<4x256xi1>, vector<4x256xf32>
    %c3 = arith.constant 3 : index
    %c0_25 = arith.constant 0 : index
    %c0_26 = arith.constant 0 : index
    %64 = vector.load %arg2[%c3, %c0_25, %c0_26] : memref<9x8x4xf32, #tpu.memory_space<vmem>>, vector<1x8x4xf32>
    %65 = vector.shape_cast %64 : vector<1x8x4xf32> to vector<8x4xf32>
    %cst_27 = arith.constant dense<0.000000e+00> : vector<8x256xf32>
    %66 = tpu.matmul %65, %63, %cst_27 {dimension_numbers = #tpu.dot_dimension_numbers<[1], [0], [0], [1], [0, 0, 1, 1], [], []>} : vector<8x4xf32>, vector<4x256xf32>, vector<8x256xf32> -> vector<8x256xf32>
    %67 = arith.addf %58, %66 : vector<8x256xf32>
    %c4 = arith.constant 4 : index
    %c0_28 = arith.constant 0 : index
    %c0_29 = arith.constant 0 : index
    %68 = vector.load %arg2[%c4, %c0_28, %c0_29] : memref<9x8x4xf32, #tpu.memory_space<vmem>>, vector<1x8x4xf32>
    %69 = vector.shape_cast %68 : vector<1x8x4xf32> to vector<8x4xf32>
    %cst_30 = arith.constant dense<0.000000e+00> : vector<8x256xf32>
    %70 = tpu.matmul %69, %29, %cst_30 {dimension_numbers = #tpu.dot_dimension_numbers<[1], [0], [0], [1], [0, 0, 1, 1], [], []>} : vector<8x4xf32>, vector<4x256xf32>, vector<8x256xf32> -> vector<8x256xf32>
    %71 = arith.addf %67, %70 : vector<8x256xf32>
    %c255_i32 = arith.constant 255 : i32
    %72 = tpu.dynamic_rotate %29 by %c255_i32 dim 1 : vector<4x256xf32>, i32 -> vector<4x256xf32>
    %cst_31 = arith.constant 0.000000e+00 : f32
    %73 = vector.shape_cast %24 : vector<1x256xi1> to vector<1x256xi1>
    %74 = vector.broadcast %73 : vector<1x256xi1> to vector<4x256xi1>
    %75 = vector.broadcast %cst_31 : f32 to vector<4x256xf32>
    %76 = arith.select %74, %72, %75 : vector<4x256xi1>, vector<4x256xf32>
    %c5 = arith.constant 5 : index
    %c0_32 = arith.constant 0 : index
    %c0_33 = arith.constant 0 : index
    %77 = vector.load %arg2[%c5, %c0_32, %c0_33] : memref<9x8x4xf32, #tpu.memory_space<vmem>>, vector<1x8x4xf32>
    %78 = vector.shape_cast %77 : vector<1x8x4xf32> to vector<8x4xf32>
    %cst_34 = arith.constant dense<0.000000e+00> : vector<8x256xf32>
    %79 = tpu.matmul %78, %76, %cst_34 {dimension_numbers = #tpu.dot_dimension_numbers<[1], [0], [0], [1], [0, 0, 1, 1], [], []>} : vector<8x4xf32>, vector<4x256xf32>, vector<8x256xf32> -> vector<8x256xf32>
    %80 = arith.addf %71, %79 : vector<8x256xf32>
    %c241_i32 = arith.constant 241 : i32
    %81 = tpu.dynamic_rotate %29 by %c241_i32 dim 1 : vector<4x256xf32>, i32 -> vector<4x256xf32>
    %82 = arith.andi %20, %22 : vector<1x256xi1>
    %cst_35 = arith.constant 0.000000e+00 : f32
    %83 = vector.shape_cast %82 : vector<1x256xi1> to vector<1x256xi1>
    %84 = vector.broadcast %83 : vector<1x256xi1> to vector<4x256xi1>
    %85 = vector.broadcast %cst_35 : f32 to vector<4x256xf32>
    %86 = arith.select %84, %81, %85 : vector<4x256xi1>, vector<4x256xf32>
    %c6 = arith.constant 6 : index
    %c0_36 = arith.constant 0 : index
    %c0_37 = arith.constant 0 : index
    %87 = vector.load %arg2[%c6, %c0_36, %c0_37] : memref<9x8x4xf32, #tpu.memory_space<vmem>>, vector<1x8x4xf32>
    %88 = vector.shape_cast %87 : vector<1x8x4xf32> to vector<8x4xf32>
    %cst_38 = arith.constant dense<0.000000e+00> : vector<8x256xf32>
    %89 = tpu.matmul %88, %86, %cst_38 {dimension_numbers = #tpu.dot_dimension_numbers<[1], [0], [0], [1], [0, 0, 1, 1], [], []>} : vector<8x4xf32>, vector<4x256xf32>, vector<8x256xf32> -> vector<8x256xf32>
    %90 = arith.addf %80, %89 : vector<8x256xf32>
    %c240_i32_39 = arith.constant 240 : i32
    %91 = tpu.dynamic_rotate %29 by %c240_i32_39 dim 1 : vector<4x256xf32>, i32 -> vector<4x256xf32>
    %cst_40 = arith.constant 0.000000e+00 : f32
    %92 = vector.shape_cast %20 : vector<1x256xi1> to vector<1x256xi1>
    %93 = vector.broadcast %92 : vector<1x256xi1> to vector<4x256xi1>
    %94 = vector.broadcast %cst_40 : f32 to vector<4x256xf32>
    %95 = arith.select %93, %91, %94 : vector<4x256xi1>, vector<4x256xf32>
    %c7 = arith.constant 7 : index
    %c0_41 = arith.constant 0 : index
    %c0_42 = arith.constant 0 : index
    %96 = vector.load %arg2[%c7, %c0_41, %c0_42] : memref<9x8x4xf32, #tpu.memory_space<vmem>>, vector<1x8x4xf32>
    %97 = vector.shape_cast %96 : vector<1x8x4xf32> to vector<8x4xf32>
    %cst_43 = arith.constant dense<0.000000e+00> : vector<8x256xf32>
    %98 = tpu.matmul %97, %95, %cst_43 {dimension_numbers = #tpu.dot_dimension_numbers<[1], [0], [0], [1], [0, 0, 1, 1], [], []>} : vector<8x4xf32>, vector<4x256xf32>, vector<8x256xf32> -> vector<8x256xf32>
    %99 = arith.addf %90, %98 : vector<8x256xf32>
    %c239_i32 = arith.constant 239 : i32
    %100 = tpu.dynamic_rotate %29 by %c239_i32 dim 1 : vector<4x256xf32>, i32 -> vector<4x256xf32>
    %101 = arith.andi %20, %24 : vector<1x256xi1>
    %cst_44 = arith.constant 0.000000e+00 : f32
    %102 = vector.shape_cast %101 : vector<1x256xi1> to vector<1x256xi1>
    %103 = vector.broadcast %102 : vector<1x256xi1> to vector<4x256xi1>
    %104 = vector.broadcast %cst_44 : f32 to vector<4x256xf32>
    %105 = arith.select %103, %100, %104 : vector<4x256xi1>, vector<4x256xf32>
    %c8 = arith.constant 8 : index
    %c0_45 = arith.constant 0 : index
    %c0_46 = arith.constant 0 : index
    %106 = vector.load %arg2[%c8, %c0_45, %c0_46] : memref<9x8x4xf32, #tpu.memory_space<vmem>>, vector<1x8x4xf32>
    %107 = vector.shape_cast %106 : vector<1x8x4xf32> to vector<8x4xf32>
    %cst_47 = arith.constant dense<0.000000e+00> : vector<8x256xf32>
    %108 = tpu.matmul %107, %105, %cst_47 {dimension_numbers = #tpu.dot_dimension_numbers<[1], [0], [0], [1], [0, 0, 1, 1], [], []>} : vector<8x4xf32>, vector<4x256xf32>, vector<8x256xf32> -> vector<8x256xf32>
    %109 = arith.addf %99, %108 : vector<8x256xf32>
    %c0_48 = arith.constant 0 : index
    %c0_49 = arith.constant 0 : index
    %c0_50 = arith.constant 0 : index
    %110 = vector.load %arg4[%c0_48, %c0_49, %c0_50] : memref<1x12x256xf32, #tpu.memory_space<vmem>>, vector<1x4x256xf32>
    %111 = vector.shape_cast %110 : vector<1x4x256xf32> to vector<4x256xf32>
    %112 = vector.shape_cast %29 : vector<4x256xf32> to vector<1x4x256xf32>
    tpu.vector_store %arg4[%c0_48, %c0_49, %c0_50], %112 {strides = array<i32>} : memref<1x12x256xf32, #tpu.memory_space<vmem>>, vector<1x4x256xf32>,
    %cst_51 = arith.constant 0.000000e+00 : f32
    %113 = vector.broadcast %cst_51 : f32 to vector<8x256xf32>
    %114 = arith.maximumf %109, %113 : vector<8x256xf32>
    %c0_52 = arith.constant 0 : index
    %c4_53 = arith.constant 4 : index
    %c0_54 = arith.constant 0 : index
    %115 = vector.load %arg4[%c0_52, %c4_53, %c0_54] : memref<1x12x256xf32, #tpu.memory_space<vmem>>, vector<1x8x256xf32>
    %116 = vector.shape_cast %115 : vector<1x8x256xf32> to vector<8x256xf32>
    %117 = vector.shape_cast %114 : vector<8x256xf32> to vector<1x8x256xf32>
    tpu.vector_store %arg4[%c0_52, %c4_53, %c0_54], %117 {strides = array<i32>} : memref<1x12x256xf32, #tpu.memory_space<vmem>>, vector<1x8x256xf32>,
    return
  }
  func.func @transform_0(%arg0: i32) -> (i32, i32, i32) {
    %c0_i32 = arith.constant 0 : i32
    %c0_i32_0 = arith.constant 0 : i32
    %c0_i32_1 = arith.constant 0 : i32
    return %arg0, %c0_i32, %c0_i32_0 : i32, i32, i32
  }
  func.func @transform_1(%arg0: i32) -> (i32, i32, i32) {
    %c0_i32 = arith.constant 0 : i32
    %c0_i32_0 = arith.constant 0 : i32
    %c0_i32_1 = arith.constant 0 : i32
    %c0_i32_2 = arith.constant 0 : i32
    return %c0_i32, %c0_i32_0, %c0_i32_1 : i32, i32, i32
  }
  func.func @transform_2(%arg0: i32) -> (i32, i32) {
    %c0_i32 = arith.constant 0 : i32
    %c0_i32_0 = arith.constant 0 : i32
    %c0_i32_1 = arith.constant 0 : i32
    return %c0_i32, %c0_i32_0 : i32, i32
  }
  func.func @transform_3(%arg0: i32) -> (i32, i32, i32) {
    %c0_i32 = arith.constant 0 : i32
    %c0_i32_0 = arith.constant 0 : i32
    %c0_i32_1 = arith.constant 0 : i32
    return %arg0, %c0_i32, %c0_i32_0 : i32, i32, i32
  }
}

</mosaic_0001>

<llo_original>
// kernel: tpu_custom_call.1
$region0: #{tpu_custom_call.1}
  #allocation0 [shape = 'u32[]', space=smem, size = 0x4, offset = 0x4, fixed_abs, tag = 'smem constant byte address 0x4 - core index']
  #allocation1 [shape = 'u32[72,128]{1,0:T(1,128)}', space=vmem, size = 0x9000, scoped, tag = 'internal scratch']
  %s0 = inlined_call_operand.vmem [shape: f32[2,4,256], index: 0, kind: input, shape index: {}]
  %s1 = inlined_call_operand.vmem [shape: f32[9,8,4], index: 1, kind: input, shape index: {}]
  %s2 = inlined_call_operand.vmem [shape: f32[8,1], index: 2, kind: input, shape index: {}]
  %s3 = inlined_call_operand.vmem [shape: f32[2,12,256], index: 3, kind: output, shape index: {}]
  %s4 = sld [smem:[#allocation0]]
  $region45: #{tpu_custom_call.1} parent=0
    _
  %s6 = ssub.s32 1, %s4
  %s7 = scalar_select 0, %s6, %s4
  loop: start=0, step=1, limit=4
  $region2: #{tpu_custom_call.1} parent=0 // loop_pre_header
    _
  $region3: #{tpu_custom_call.1} parent=0 // loop_header
    %s9 = sphi 0, %s13
    %p10 = scmp.ge.s32.totalorder %s9, 4
    %s19 = sphi 0, %s21
    %s22 = sphi 0, %s19
    %s23 = sphi 0, %s22
    %s39 = sphi 0, %s23
    %s43 = sphi 0, %s43
    %s45 = sphi 0, %s43
    %s46 = sphi 0, %s45
    %s60 = sphi 0, %s46
    %s64 = sphi 0, %s64
    %s66 = sphi 0, %s64
    %s67 = sphi 0, %s66
    %s81 = sphi 0, %s67
    %s87 = sphi 0, %s89
    %s90 = sphi 0, %s87
    %s91 = sphi 0, %s90
    %s107 = sphi 0, %s91
  $region4: #{tpu_custom_call.1} parent=0 // loop_header_branch
    %12 = sbr.rel (%p10) target = $region8
  $region5: #{tpu_custom_call.1} parent=0 // loop_body
    %s14 = ssub.s32 %s9, 1
    %s15 = ssub.s32 %s9, 2
    %s16 = sadd.s32 %s9, 1
    %s17 = ssub.s32 %s9, %s16
    %p18 = scmp.eq.s32.totalorder %s17, 0
    %s20 = sadd.s32 %s19, 1
    %s21 = scalar_select %p18, %s19, %s20
    %p24 = pneg %p18
    %p25 = scmp.eq.s32.totalorder %s9, 1
    %p26 = por %p24, %p25
    %p27 = scmp.ne.s32.totalorder %s19, %s22
    %p28 = scmp.eq.s32.totalorder %s9, 0
    %p29 = por %p27, %p28
    %p30 = scmp.ne.s32.totalorder %s19, %s22
    %p31 = scmp.eq.s32.totalorder %s14, 1
    %p32 = por %p30, %p31
    %p33 = scmp.ne.s32.totalorder %s22, %s23
    %p34 = scmp.eq.s32.totalorder %s14, 0
    %p35 = por %p33, %p34
    %p36 = scmp.ne.s32.totalorder %s22, %s23
    %p37 = scmp.eq.s32.totalorder %s15, 1
    %p38 = por %p36, %p37
    %p40 = scmp.ne.s32.totalorder %s23, %s39
    %p41 = scmp.eq.s32.totalorder %s15, 0
    %p42 = por %p40, %p41
    %s44 = sadd.s32 %s43, 1
    %p47 = scmp.eq.s32.totalorder %s9, 1
    %p48 = scmp.ne.s32.totalorder %s43, %s45
    %p49 = scmp.eq.s32.totalorder %s9, 0
    %p50 = por %p48, %p49
    %p51 = scmp.ne.s32.totalorder %s43, %s45
    %p52 = scmp.eq.s32.totalorder %s14, 1
    %p53 = por %p51, %p52
    %p54 = scmp.ne.s32.totalorder %s45, %s46
    %p55 = scmp.eq.s32.totalorder %s14, 0
    %p56 = por %p54, %p55
    %p57 = scmp.ne.s32.totalorder %s45, %s46
    %p58 = scmp.eq.s32.totalorder %s15, 1
    %p59 = por %p57, %p58
    %p61 = scmp.ne.s32.totalorder %s46, %s60
    %p62 = scmp.eq.s32.totalorder %s15, 0
    %p63 = por %p61, %p62
    %s65 = sadd.s32 %s64, 1
    %p68 = scmp.eq.s32.totalorder %s9, 1
    %p69 = scmp.ne.s32.totalorder %s64, %s66
    %p70 = scmp.eq.s32.totalorder %s9, 0
    %p71 = por %p69, %p70
    %p72 = scmp.ne.s32.totalorder %s64, %s66
    %p73 = scmp.eq.s32.totalorder %s14, 1
    %p74 = por %p72, %p73
    %p75 = scmp.ne.s32.totalorder %s66, %s67
    %p76 = scmp.eq.s32.totalorder %s14, 0
    %p77 = por %p75, %p76
    %p78 = scmp.ne.s32.totalorder %s66, %s67
    %p79 = scmp.eq.s32.totalorder %s15, 1
    %p80 = por %p78, %p79
    %p82 = scmp.ne.s32.totalorder %s67, %s81
    %p83 = scmp.eq.s32.totalorder %s15, 0
    %p84 = por %p82, %p83
    %s85 = ssub.s32 %s9, %s16
    %p86 = scmp.eq.s32.totalorder %s85, 0
    %s88 = sadd.s32 %s87, 1
    %s89 = scalar_select %p86, %s87, %s88
    %p92 = pneg %p86
    %p93 = scmp.eq.s32.totalorder %s9, 1
    %p94 = por %p92, %p93
    %p95 = scmp.ne.s32.totalorder %s87, %s90
    %p96 = scmp.eq.s32.totalorder %s9, 0
    %p97 = por %p95, %p96
    %p98 = scmp.ne.s32.totalorder %s87, %s90
    %p99 = scmp.eq.s32.totalorder %s14, 1
    %p100 = por %p98, %p99
    %p101 = scmp.ne.s32.totalorder %s90, %s91
    %p102 = scmp.eq.s32.totalorder %s14, 0
    %p103 = por %p101, %p102
    %p104 = scmp.ne.s32.totalorder %s90, %s91
    %p105 = scmp.eq.s32.totalorder %s15, 1
    %p106 = por %p104, %p105
    %p108 = scmp.ne.s32.totalorder %s91, %s107
    %p109 = scmp.eq.s32.totalorder %s15, 0
    %p110 = por %p108, %p109
    %p111 = scmp.le.s32.totalorder 1, %s9
    %p112 = scmp.lt.s32.totalorder %s9, 3
    %p113 = pnand %p111, %p112
    %p114 = pneg %p113
    // Predicated region
    $region9: #{tpu_custom_call.1} parent=5 // pred_check
      _
    $region10: #{tpu_custom_call.1} parent=5 // pred_check_branch
      %116 = sbr.rel (%p113) target = $region12
    $region11: #{tpu_custom_call.1} parent=5 // pred_region
      %s117 = ssub.s32 %s9, 1
      // Predicated region
      $region13: #{tpu_custom_call.1} parent=11 // pred_check
        %p118 = pneg %p56
      $region14: #{tpu_custom_call.1} parent=11 // pred_check_branch
        %120 = sbr.rel (%p118) target = $region16
      $region15: #{tpu_custom_call.1} parent=11 // pred_region
        _
      $region16: #{tpu_custom_call.1} parent=11 // pred_fallthru
        _
      // Predicated region
      $region17: #{tpu_custom_call.1} parent=11 // pred_check
        %p121 = pneg %p77
      $region18: #{tpu_custom_call.1} parent=11 // pred_check_branch
        %123 = sbr.rel (%p121) target = $region20
      $region19: #{tpu_custom_call.1} parent=11 // pred_region
        _
      $region20: #{tpu_custom_call.1} parent=11 // pred_fallthru
        _
    $region12: #{tpu_custom_call.1} parent=5 // pred_fallthru
      _
    %p124 = scmp.lt.s32.totalorder %s9, 2
    // Predicated region
    $region21: #{tpu_custom_call.1} parent=5 // pred_check
      %p125 = pneg %p124
    $region22: #{tpu_custom_call.1} parent=5 // pred_check_branch
      %127 = sbr.rel (%p125) target = $region24
    $region23: #{tpu_custom_call.1} parent=5 // pred_region
      // Predicated region
      $region25: #{tpu_custom_call.1} parent=23 // pred_check
        %p128 = pneg %p29
      $region26: #{tpu_custom_call.1} parent=23 // pred_check_branch
        %130 = sbr.rel (%p128) target = $region28
      $region27: #{tpu_custom_call.1} parent=23 // pred_region
        %p131 = scmp.lt.s32.totalorder %s9, 1
        %s132 = scalar_select %p131, %s9, 1
        %s133 = smul.addr %s132, 2
        %s134 = smul.addr %s133, 4
        %s135 = scalar_lea.vmem %s0, %s134
      $region28: #{tpu_custom_call.1} parent=23 // pred_fallthru
        _
    $region24: #{tpu_custom_call.1} parent=5 // pred_fallthru
      _
    %p136 = scmp.le.s32.totalorder 1, %s9
    %p137 = scmp.lt.s32.totalorder %s9, 3
    %p138 = pnand %p136, %p137
    %p139 = pneg %p138
    // Predicated region
    $region29: #{tpu_custom_call.1} parent=5 // pred_check
      _
    $region30: #{tpu_custom_call.1} parent=5 // pred_check_branch
      %141 = sbr.rel (%p138) target = $region32
    $region31: #{tpu_custom_call.1} parent=5 // pred_region
      %s142 = ssub.s32 %s9, 1
      %p143 = scmp.lt.s32.totalorder %s14, 1
      %s144 = scalar_select %p143, %s14, 1
      %s145 = smul.addr %s144, 2
      %s146 = smul.addr %s145, 4
      %s147 = scalar_lea.vmem %s0, %s146
      %p148 = pneg %p35
      %p149 = pneg %p32
      %p150 = pneg %p56
      %p151 = pneg %p53
      %p152 = pneg %p77
      %p153 = pneg %p74
      %p154 = pneg %p103
      %p155 = pneg %p100
      %p156 = scmp.lt.s32.totalorder %s14, 1
      %s157 = scalar_select %p156, %s14, 1
      %s158 = smul.addr %s157, 4
      %s159 = smul.addr %s158, 8
      %s160 = scalar_lea.vmem %s3, %s159
      %p161 = scmp.lt.s32.totalorder %s14, 1
      %s162 = scalar_select %p161, %s14, 1
      %s163 = smul.addr %s162, 2
      %s164 = smul.addr %s163, 4
      %s165 = scalar_lea.vmem %s0, %s164
      %p166 = scmp.lt.s32.totalorder %s14, 1
      %s167 = scalar_select %p166, %s14, 1
      %s168 = smul.addr %s167, 4
      %s169 = smul.addr %s168, 8
      %s170 = scalar_lea.vmem %s3, %s169
      %v171 = vlaneseq
      %v172 = vand.u32 %v171, 127
      %v173 = vadd.s32 %v172, 128
      %vm174 = vcmp.lt.s32.totalorder %v172, 0
      %v175 = vsub.s32 0, %v172
      %v176 = vsel %vm174, %v175, %v172
      %v177 = vshrl.u32 %v176, 4
      %v178 = vand.u32 %v176, 15
      %v179 = vsub.s32 0, %v178
      %v180 = vsel %vm174, %v179, %v178
      %vm181 = vcmp.lt.s32.totalorder %v173, 0
      %v182 = vsub.s32 0, %v173
      %v183 = vsel %vm181, %v182, %v173
      %v184 = vshrl.u32 %v183, 4
      %v185 = vand.u32 %v183, 15
      %v186 = vsub.s32 0, %v185
      %v187 = vsel %vm181, %v186, %v185
      %vm188 = vcmp.ne.s32.totalorder %v180, 0
      %vm189 = vcmp.ne.s32.totalorder %v187, 0
      %vm190 = vcmp.lt.s32.totalorder %v180, 0
      %vm191 = vcmp.lt.s32.totalorder %v187, 0
      %vm192 = vmand %vm190, %vm188
      %vm193 = vmand %vm191, %vm189
      %v194 = vadd.s32 %v180, 16
      %v195 = vadd.s32 %v187, 16
      %v196 = vsel %vm192, %v194, %v180
      %v197 = vsel %vm193, %v195, %v187
      %vm198 = vcmp.ge.s32.totalorder %v172, 16
      %vm199 = vcmp.ge.s32.totalorder %v173, 16
      %vm200 = vcmp.lt.s32.totalorder %v172, 240
      %vm201 = vcmp.lt.s32.totalorder %v173, 240
      %vm202 = vcmp.ge.s32.totalorder %v196, 1
      %vm203 = vcmp.ge.s32.totalorder %v197, 1
      %vm204 = vcmp.lt.s32.totalorder %v196, 15
      %vm205 = vcmp.lt.s32.totalorder %v197, 15
      %v206 = vld [vmem:[%s2] sm:$0xff]
      %208 = vset.pattern.permute.xlu0 0
      %209 = vperm.xlu0 %208, %v206
      %v210 = vpop.permute.xlu0 %209
      %v212 = vld [vmem:[%s165] sm:$0xff]
      %214 = vst [vmem:[#allocation1] ss:$2 sm:$0xff] %v212
      %v215 = vld.sshfl [vmem:[#allocation1] sm:$0xff pattern:$0x75316420]
      %v216 = vld.sshfl [vmem:[#allocation1 + $0x8] sm:$0xff pattern:$0x75316420]
      %219 = vrot.lane.b32.xlu0 %v215, 17
      %v220 = vpop.permute.xlu0 %219
      %221 = vrot.lane.b32.xlu0 %v216, 17
      %v222 = vpop.permute.xlu0 %221
      %vm223 = vcmp.lt.s32.totalorder %v172, 17
      %v224 = vsel %vm223, %v220, %v222
      %v225 = vsel %vm223, %v222, %v220
      %vm226 = vmand %vm198, %vm202
      %vm227 = vmand %vm199, %vm203
      %v228 = vsel %vm226, 1, 0
      %v229 = vsel %vm227, 1, 0
      %vm230 = vcmp.eq.s32.totalorder %v228, 1
      %vm231 = vcmp.eq.s32.totalorder %v229, 1
      %v232 = vsel %vm230, %v225, 0.0
      %v233 = vsel %vm231, %v224, 0.0
      %v234 = vld [vmem:[%s1] sm:$0xff]
      %vm235 = vcmask 31744
      %v237 = vsel %vm235, %v234, 0
      %vm239 = vcmask 1043456
      %v241 = vsel %vm239, %v232, 0
      %v244 = vsel %vm239, %v233, 0
      %246 = vmatpush.msra.mxu0 0.0
      %247 = vmatpush.msra.mxu0 0.0
      %248 = vmatpush.msra.mxu0 0.0
      %249 = vmatpush.msra.mxu0 0.0
      %250 = vmatpush.msra.mxu0 0.0
      %251 = vmatpush.msra.mxu0 0.0
      %252 = vmatpush.msra.mxu0 0.0
      %253 = vmatpush.msra.mxu0 0.0
      %254 = vmatpush.msra.mxu0 0.0
      %255 = vmatpush.msra.mxu0 0.0
      %256 = vmatpush.msra.mxu0 0.0
      %257 = vmatpush.msra.mxu0 0.0
      %258 = vmatpush.msra.mxu0 0.0
      %259 = vmatpush.msra.mxu0 0.0
      %260 = vmatpush.msra.mxu0 0.0
      %261 = vmatpush.msra.mxu0 %v241
      %262 = vmatmul.f32.gmra.mxu0 %v237
      %v263 = vpop.f32.mrf.mxu0
      %v264 = vadd.f32 0.0, %v263
      %265 = vdwg.mxu0
      %266 = vmatpush.msra.mxu0 0.0
      %267 = vmatpush.msra.mxu0 0.0
      %268 = vmatpush.msra.mxu0 0.0
      %269 = vmatpush.msra.mxu0 0.0
      %270 = vmatpush.msra.mxu0 0.0
      %271 = vmatpush.msra.mxu0 0.0
      %272 = vmatpush.msra.mxu0 0.0
      %273 = vmatpush.msra.mxu0 0.0
      %274 = vmatpush.msra.mxu0 0.0
      %275 = vmatpush.msra.mxu0 0.0
      %276 = vmatpush.msra.mxu0 0.0
      %277 = vmatpush.msra.mxu0 0.0
      %278 = vmatpush.msra.mxu0 0.0
      %279 = vmatpush.msra.mxu0 0.0
      %280 = vmatpush.msra.mxu0 0.0
      %281 = vmatpush.msra.mxu0 %v244
      %282 = vmatmul.f32.gmra.mxu0 %v237
      %v283 = vpop.f32.mrf.mxu0
      %v284 = vadd.f32 0.0, %v283
      %285 = vdwg.mxu0
      %v286 = vadd.f32 %v210, %v264
      %v287 = vadd.f32 %v210, %v284
      %288 = vst [vmem:[#allocation1] ss:$2 sm:$0xff] %v212
      %v289 = vld.sshfl [vmem:[#allocation1] sm:$0xff pattern:$0x75316420]
      %v290 = vld.sshfl [vmem:[#allocation1 + $0x8] sm:$0xff pattern:$0x75316420]
      %293 = vrot.lane.b32.xlu0 %v289, 16
      %v294 = vpop.permute.xlu0 %293
      %295 = vrot.lane.b32.xlu0 %v290, 16
      %v296 = vpop.permute.xlu0 %295
      %vm297 = vcmp.lt.s32.totalorder %v172, 16
      %v298 = vsel %vm297, %v294, %v296
      %v299 = vsel %vm297, %v296, %v294
      %v300 = vsel %vm198, 1, 0
      %v301 = vsel %vm199, 1, 0
      %vm302 = vcmp.eq.s32.totalorder %v300, 1
      %vm303 = vcmp.eq.s32.totalorder %v301, 1
      %v304 = vsel %vm302, %v299, 0.0
      %v305 = vsel %vm303, %v298, 0.0
      %s306 = scalar_lea.vmem %s1, 8
      %v307 = vld [vmem:[%s306] sm:$0xff]
      %v309 = vsel %vm235, %v307, 0
      %v312 = vsel %vm239, %v304, 0
      %v315 = vsel %vm239, %v305, 0
      %317 = vmatpush.msra.mxu0 0.0
      %318 = vmatpush.msra.mxu0 0.0
      %319 = vmatpush.msra.mxu0 0.0
      %320 = vmatpush.msra.mxu0 0.0
      %321 = vmatpush.msra.mxu0 0.0
      %322 = vmatpush.msra.mxu0 0.0
      %323 = vmatpush.msra.mxu0 0.0
      %324 = vmatpush.msra.mxu0 0.0
      %325 = vmatpush.msra.mxu0 0.0
      %326 = vmatpush.msra.mxu0 0.0
      %327 = vmatpush.msra.mxu0 0.0
      %328 = vmatpush.msra.mxu0 0.0
      %329 = vmatpush.msra.mxu0 0.0
      %330 = vmatpush.msra.mxu0 0.0
      %331 = vmatpush.msra.mxu0 0.0
      %332 = vmatpush.msra.mxu0 %v312
      %333 = vmatmul.f32.gmra.mxu0 %v309
      %v334 = vpop.f32.mrf.mxu0
      %v335 = vadd.f32 0.0, %v334
      %336 = vdwg.mxu0
      %337 = vmatpush.msra.mxu0 0.0
      %338 = vmatpush.msra.mxu0 0.0
      %339 = vmatpush.msra.mxu0 0.0
      %340 = vmatpush.msra.mxu0 0.0
      %341 = vmatpush.msra.mxu0 0.0
      %342 = vmatpush.msra.mxu0 0.0
      %343 = vmatpush.msra.mxu0 0.0
      %344 = vmatpush.msra.mxu0 0.0
      %345 = vmatpush.msra.mxu0 0.0
      %346 = vmatpush.msra.mxu0 0.0
      %347 = vmatpush.msra.mxu0 0.0
      %348 = vmatpush.msra.mxu0 0.0
      %349 = vmatpush.msra.mxu0 0.0
      %350 = vmatpush.msra.mxu0 0.0
      %351 = vmatpush.msra.mxu0 0.0
      %352 = vmatpush.msra.mxu0 %v315
      %353 = vmatmul.f32.gmra.mxu0 %v309
      %v354 = vpop.f32.mrf.mxu0
      %v355 = vadd.f32 0.0, %v354
      %356 = vdwg.mxu0
      %v357 = vadd.f32 %v286, %v335
      %v358 = vadd.f32 %v287, %v355
      %359 = vst [vmem:[#allocation1] ss:$2 sm:$0xff] %v212
      %v360 = vld.sshfl [vmem:[#allocation1] sm:$0xff pattern:$0x75316420]
      %v361 = vld.sshfl [vmem:[#allocation1 + $0x8] sm:$0xff pattern:$0x75316420]
      %364 = vrot.lane.b32.xlu0 %v360, 15
      %v365 = vpop.permute.xlu0 %364
      %366 = vrot.lane.b32.xlu0 %v361, 15
      %v367 = vpop.permute.xlu0 %366
      %vm368 = vcmp.lt.s32.totalorder %v172, 15
      %v369 = vsel %vm368, %v365, %v367
      %v370 = vsel %vm368, %v367, %v365
      %vm371 = vmand %vm198, %vm204
      %vm372 = vmand %vm199, %vm205
      %v373 = vsel %vm371, 1, 0
      %v374 = vsel %vm372, 1, 0
      %vm375 = vcmp.eq.s32.totalorder %v373, 1
      %vm376 = vcmp.eq.s32.totalorder %v374, 1
      %v377 = vsel %vm375, %v370, 0.0
      %v378 = vsel %vm376, %v369, 0.0
      %s379 = scalar_lea.vmem %s1, 16
      %v380 = vld [vmem:[%s379] sm:$0xff]
      %v382 = vsel %vm235, %v380, 0
      %v385 = vsel %vm239, %v377, 0
      %v388 = vsel %vm239, %v378, 0
      %390 = vmatpush.msra.mxu0 0.0
      %391 = vmatpush.msra.mxu0 0.0
      %392 = vmatpush.msra.mxu0 0.0
      %393 = vmatpush.msra.mxu0 0.0
      %394 = vmatpush.msra.mxu0 0.0
      %395 = vmatpush.msra.mxu0 0.0
      %396 = vmatpush.msra.mxu0 0.0
      %397 = vmatpush.msra.mxu0 0.0
      %398 = vmatpush.msra.mxu0 0.0
      %399 = vmatpush.msra.mxu0 0.0
      %400 = vmatpush.msra.mxu0 0.0
      %401 = vmatpush.msra.mxu0 0.0
      %402 = vmatpush.msra.mxu0 0.0
      %403 = vmatpush.msra.mxu0 0.0
      %404 = vmatpush.msra.mxu0 0.0
      %405 = vmatpush.msra.mxu0 %v385
      %406 = vmatmul.f32.gmra.mxu0 %v382
      %v407 = vpop.f32.mrf.mxu0
      %v408 = vadd.f32 0.0, %v407
      %409 = vdwg.mxu0
      %410 = vmatpush.msra.mxu0 0.0
      %411 = vmatpush.msra.mxu0 0.0
      %412 = vmatpush.msra.mxu0 0.0
      %413 = vmatpush.msra.mxu0 0.0
      %414 = vmatpush.msra.mxu0 0.0
      %415 = vmatpush.msra.mxu0 0.0
      %416 = vmatpush.msra.mxu0 0.0
      %417 = vmatpush.msra.mxu0 0.0
      %418 = vmatpush.msra.mxu0 0.0
      %419 = vmatpush.msra.mxu0 0.0
      %420 = vmatpush.msra.mxu0 0.0
      %421 = vmatpush.msra.mxu0 0.0
      %422 = vmatpush.msra.mxu0 0.0
      %423 = vmatpush.msra.mxu0 0.0
      %424 = vmatpush.msra.mxu0 0.0
      %425 = vmatpush.msra.mxu0 %v388
      %426 = vmatmul.f32.gmra.mxu0 %v382
      %v427 = vpop.f32.mrf.mxu0
      %v428 = vadd.f32 0.0, %v427
      %429 = vdwg.mxu0
      %v430 = vadd.f32 %v357, %v408
      %v431 = vadd.f32 %v358, %v428
      %432 = vst [vmem:[#allocation1] ss:$2 sm:$0xff] %v212
      %v433 = vld.sshfl [vmem:[#allocation1] sm:$0xff pattern:$0x75316420]
      %v434 = vld.sshfl [vmem:[#allocation1 + $0x8] sm:$0xff pattern:$0x75316420]
      %437 = vrot.lane.b32.xlu0 %v433, 1
      %v438 = vpop.permute.xlu0 %437
      %439 = vrot.lane.b32.xlu0 %v434, 1
      %v440 = vpop.permute.xlu0 %439
      %vm441 = vcmp.lt.s32.totalorder %v172, 1
      %v442 = vsel %vm441, %v438, %v440
      %v443 = vsel %vm441, %v440, %v438
      %v444 = vsel %vm202, 1, 0
      %v445 = vsel %vm203, 1, 0
      %vm446 = vcmp.eq.s32.totalorder %v444, 1
      %vm447 = vcmp.eq.s32.totalorder %v445, 1
      %v448 = vsel %vm446, %v443, 0.0
      %v449 = vsel %vm447, %v442, 0.0
      %s450 = scalar_lea.vmem %s1, 24
      %v451 = vld [vmem:[%s450] sm:$0xff]
      %v453 = vsel %vm235, %v451, 0
      %v456 = vsel %vm239, %v448, 0
      %v459 = vsel %vm239, %v449, 0
      %461 = vmatpush.msra.mxu0 0.0
      %462 = vmatpush.msra.mxu0 0.0
      %463 = vmatpush.msra.mxu0 0.0
      %464 = vmatpush.msra.mxu0 0.0
      %465 = vmatpush.msra.mxu0 0.0
      %466 = vmatpush.msra.mxu0 0.0
      %467 = vmatpush.msra.mxu0 0.0
      %468 = vmatpush.msra.mxu0 0.0
      %469 = vmatpush.msra.mxu0 0.0
      %470 = vmatpush.msra.mxu0 0.0
      %471 = vmatpush.msra.mxu0 0.0
      %472 = vmatpush.msra.mxu0 0.0
      %473 = vmatpush.msra.mxu0 0.0
      %474 = vmatpush.msra.mxu0 0.0
      %475 = vmatpush.msra.mxu0 0.0
      %476 = vmatpush.msra.mxu0 %v456
      %477 = vmatmul.f32.gmra.mxu0 %v453
      %v478 = vpop.f32.mrf.mxu0
      %v479 = vadd.f32 0.0, %v478
      %480 = vdwg.mxu0
      %481 = vmatpush.msra.mxu0 0.0
      %482 = vmatpush.msra.mxu0 0.0
      %483 = vmatpush.msra.mxu0 0.0
      %484 = vmatpush.msra.mxu0 0.0
      %485 = vmatpush.msra.mxu0 0.0
      %486 = vmatpush.msra.mxu0 0.0
      %487 = vmatpush.msra.mxu0 0.0
      %488 = vmatpush.msra.mxu0 0.0
      %489 = vmatpush.msra.mxu0 0.0
      %490 = vmatpush.msra.mxu0 0.0
      %491 = vmatpush.msra.mxu0 0.0
      %492 = vmatpush.msra.mxu0 0.0
      %493 = vmatpush.msra.mxu0 0.0
      %494 = vmatpush.msra.mxu0 0.0
      %495 = vmatpush.msra.mxu0 0.0
      %496 = vmatpush.msra.mxu0 %v459
      %497 = vmatmul.f32.gmra.mxu0 %v453
      %v498 = vpop.f32.mrf.mxu0
      %v499 = vadd.f32 0.0, %v498
      %500 = vdwg.mxu0
      %v501 = vadd.f32 %v430, %v479
      %v502 = vadd.f32 %v431, %v499
      %s503 = scalar_lea.vmem %s1, 32
      %v504 = vld [vmem:[%s503] sm:$0xff]
      %505 = vst [vmem:[#allocation1] ss:$2 sm:$0xff] %v212
      %v506 = vld.sshfl [vmem:[#allocation1] sm:$0xff pattern:$0x75316420]
      %v507 = vld.sshfl [vmem:[#allocation1 + $0x8] sm:$0xff pattern:$0x75316420]
      %v509 = vsel %vm235, %v504, 0
      %v511 = vsel %vm239, %v506, 0
      %v513 = vsel %vm239, %v507, 0
      %515 = vmatpush.msra.mxu0 0.0
      %516 = vmatpush.msra.mxu0 0.0
      %517 = vmatpush.msra.mxu0 0.0
      %518 = vmatpush.msra.mxu0 0.0
      %519 = vmatpush.msra.mxu0 0.0
      %520 = vmatpush.msra.mxu0 0.0
      %521 = vmatpush.msra.mxu0 0.0
      %522 = vmatpush.msra.mxu0 0.0
      %523 = vmatpush.msra.mxu0 0.0
      %524 = vmatpush.msra.mxu0 0.0
      %525 = vmatpush.msra.mxu0 0.0
      %526 = vmatpush.msra.mxu0 0.0
      %527 = vmatpush.msra.mxu0 0.0
      %528 = vmatpush.msra.mxu0 0.0
      %529 = vmatpush.msra.mxu0 0.0
      %530 = vmatpush.msra.mxu0 %v511
      %531 = vmatmul.f32.gmra.mxu0 %v509
      %v532 = vpop.f32.mrf.mxu0
      %v533 = vadd.f32 0.0, %v532
      %534 = vdwg.mxu0
      %535 = vmatpush.msra.mxu0 0.0
      %536 = vmatpush.msra.mxu0 0.0
      %537 = vmatpush.msra.mxu0 0.0
      %538 = vmatpush.msra.mxu0 0.0
      %539 = vmatpush.msra.mxu0 0.0
      %540 = vmatpush.msra.mxu0 0.0
      %541 = vmatpush.msra.mxu0 0.0
      %542 = vmatpush.msra.mxu0 0.0
      %543 = vmatpush.msra.mxu0 0.0
      %544 = vmatpush.msra.mxu0 0.0
      %545 = vmatpush.msra.mxu0 0.0
      %546 = vmatpush.msra.mxu0 0.0
      %547 = vmatpush.msra.mxu0 0.0
      %548 = vmatpush.msra.mxu0 0.0
      %549 = vmatpush.msra.mxu0 0.0
      %550 = vmatpush.msra.mxu0 %v513
      %551 = vmatmul.f32.gmra.mxu0 %v509
      %v552 = vpop.f32.mrf.mxu0
      %v553 = vadd.f32 0.0, %v552
      %554 = vdwg.mxu0
      %v555 = vadd.f32 %v501, %v533
      %v556 = vadd.f32 %v502, %v553
      %557 = vst [vmem:[#allocation1] ss:$2 sm:$0xff] %v212
      %v558 = vld.sshfl [vmem:[#allocation1] sm:$0xff pattern:$0x75316420]
      %v559 = vld.sshfl [vmem:[#allocation1 + $0x8] sm:$0xff pattern:$0x75316420]
      %562 = vrot.lane.b32.xlu0 %v558, 127
      %v563 = vpop.permute.xlu0 %562
      %564 = vrot.lane.b32.xlu0 %v559, 127
      %v565 = vpop.permute.xlu0 %564
      %vm566 = vcmp.lt.s32.totalorder %v172, 127
      %v567 = vsel %vm566, %v563, %v565
      %v568 = vsel %vm566, %v565, %v563
      %v569 = vsel %vm204, 1, 0
      %v570 = vsel %vm205, 1, 0
      %vm571 = vcmp.eq.s32.totalorder %v569, 1
      %vm572 = vcmp.eq.s32.totalorder %v570, 1
      %v573 = vsel %vm571, %v567, 0.0
      %v574 = vsel %vm572, %v568, 0.0
      %s575 = scalar_lea.vmem %s1, 40
      %v576 = vld [vmem:[%s575] sm:$0xff]
      %v578 = vsel %vm235, %v576, 0
      %v581 = vsel %vm239, %v573, 0
      %v584 = vsel %vm239, %v574, 0
      %586 = vmatpush.msra.mxu0 0.0
      %587 = vmatpush.msra.mxu0 0.0
      %588 = vmatpush.msra.mxu0 0.0
      %589 = vmatpush.msra.mxu0 0.0
      %590 = vmatpush.msra.mxu0 0.0
      %591 = vmatpush.msra.mxu0 0.0
      %592 = vmatpush.msra.mxu0 0.0
      %593 = vmatpush.msra.mxu0 0.0
      %594 = vmatpush.msra.mxu0 0.0
      %595 = vmatpush.msra.mxu0 0.0
      %596 = vmatpush.msra.mxu0 0.0
      %597 = vmatpush.msra.mxu0 0.0
      %598 = vmatpush.msra.mxu0 0.0
      %599 = vmatpush.msra.mxu0 0.0
      %600 = vmatpush.msra.mxu0 0.0
      %601 = vmatpush.msra.mxu0 %v581
      %602 = vmatmul.f32.gmra.mxu0 %v578
      %v603 = vpop.f32.mrf.mxu0
      %v604 = vadd.f32 0.0, %v603
      %605 = vdwg.mxu0
      %606 = vmatpush.msra.mxu0 0.0
      %607 = vmatpush.msra.mxu0 0.0
      %608 = vmatpush.msra.mxu0 0.0
      %609 = vmatpush.msra.mxu0 0.0
      %610 = vmatpush.msra.mxu0 0.0
      %611 = vmatpush.msra.mxu0 0.0
      %612 = vmatpush.msra.mxu0 0.0
      %613 = vmatpush.msra.mxu0 0.0
      %614 = vmatpush.msra.mxu0 0.0
      %615 = vmatpush.msra.mxu0 0.0
      %616 = vmatpush.msra.mxu0 0.0
      %617 = vmatpush.msra.mxu0 0.0
      %618 = vmatpush.msra.mxu0 0.0
      %619 = vmatpush.msra.mxu0 0.0
      %620 = vmatpush.msra.mxu0 0.0
      %621 = vmatpush.msra.mxu0 %v584
      %622 = vmatmul.f32.gmra.mxu0 %v578
      %v623 = vpop.f32.mrf.mxu0
      %v624 = vadd.f32 0.0, %v623
      %625 = vdwg.mxu0
      %v626 = vadd.f32 %v555, %v604
      %v627 = vadd.f32 %v556, %v624
      %628 = vst [vmem:[#allocation1] ss:$2 sm:$0xff] %v212
      %v629 = vld.sshfl [vmem:[#allocation1] sm:$0xff pattern:$0x75316420]
      %v630 = vld.sshfl [vmem:[#allocation1 + $0x8] sm:$0xff pattern:$0x75316420]
      %633 = vrot.lane.b32.xlu0 %v629, 113
      %v634 = vpop.permute.xlu0 %633
      %635 = vrot.lane.b32.xlu0 %v630, 113
      %v636 = vpop.permute.xlu0 %635
      %vm637 = vcmp.lt.s32.totalorder %v172, 113
      %v638 = vsel %vm637, %v634, %v636
      %v639 = vsel %vm637, %v636, %v634
      %vm640 = vmand %vm200, %vm202
      %vm641 = vmand %vm201, %vm203
      %v642 = vsel %vm640, 1, 0
      %v643 = vsel %vm641, 1, 0
      %vm644 = vcmp.eq.s32.totalorder %v642, 1
      %vm645 = vcmp.eq.s32.totalorder %v643, 1
      %v646 = vsel %vm644, %v638, 0.0
      %v647 = vsel %vm645, %v639, 0.0
      %s648 = scalar_lea.vmem %s1, 48
      %v649 = vld [vmem:[%s648] sm:$0xff]
      %v651 = vsel %vm235, %v649, 0
      %v654 = vsel %vm239, %v646, 0
      %v657 = vsel %vm239, %v647, 0
      %659 = vmatpush.msra.mxu0 0.0
      %660 = vmatpush.msra.mxu0 0.0
      %661 = vmatpush.msra.mxu0 0.0
      %662 = vmatpush.msra.mxu0 0.0
      %663 = vmatpush.msra.mxu0 0.0
      %664 = vmatpush.msra.mxu0 0.0
      %665 = vmatpush.msra.mxu0 0.0
      %666 = vmatpush.msra.mxu0 0.0
      %667 = vmatpush.msra.mxu0 0.0
      %668 = vmatpush.msra.mxu0 0.0
      %669 = vmatpush.msra.mxu0 0.0
      %670 = vmatpush.msra.mxu0 0.0
      %671 = vmatpush.msra.mxu0 0.0
      %672 = vmatpush.msra.mxu0 0.0
      %673 = vmatpush.msra.mxu0 0.0
      %674 = vmatpush.msra.mxu0 %v654
      %675 = vmatmul.f32.gmra.mxu0 %v651
      %v676 = vpop.f32.mrf.mxu0
      %v677 = vadd.f32 0.0, %v676
      %678 = vdwg.mxu0
      %679 = vmatpush.msra.mxu0 0.0
      %680 = vmatpush.msra.mxu0 0.0
      %681 = vmatpush.msra.mxu0 0.0
      %682 = vmatpush.msra.mxu0 0.0
      %683 = vmatpush.msra.mxu0 0.0
      %684 = vmatpush.msra.mxu0 0.0
      %685 = vmatpush.msra.mxu0 0.0
      %686 = vmatpush.msra.mxu0 0.0
      %687 = vmatpush.msra.mxu0 0.0
      %688 = vmatpush.msra.mxu0 0.0
      %689 = vmatpush.msra.mxu0 0.0
      %690 = vmatpush.msra.mxu0 0.0
      %691 = vmatpush.msra.mxu0 0.0
      %692 = vmatpush.msra.mxu0 0.0
      %693 = vmatpush.msra.mxu0 0.0
      %694 = vmatpush.msra.mxu0 %v657
      %695 = vmatmul.f32.gmra.mxu0 %v651
      %v696 = vpop.f32.mrf.mxu0
      %v697 = vadd.f32 0.0, %v696
      %698 = vdwg.mxu0
      %v699 = vadd.f32 %v626, %v677
      %v700 = vadd.f32 %v627, %v697
      %701 = vst [vmem:[#allocation1] ss:$2 sm:$0xff] %v212
      %v702 = vld.sshfl [vmem:[#allocation1] sm:$0xff pattern:$0x75316420]
      %v703 = vld.sshfl [vmem:[#allocation1 + $0x8] sm:$0xff pattern:$0x75316420]
      %706 = vrot.lane.b32.xlu0 %v702, 112
      %v707 = vpop.permute.xlu0 %706
      %708 = vrot.lane.b32.xlu0 %v703, 112
      %v709 = vpop.permute.xlu0 %708
      %vm710 = vcmp.lt.s32.totalorder %v172, 112
      %v711 = vsel %vm710, %v707, %v709
      %v712 = vsel %vm710, %v709, %v707
      %v713 = vsel %vm200, 1, 0
      %v714 = vsel %vm201, 1, 0
      %vm715 = vcmp.eq.s32.totalorder %v713, 1
      %vm716 = vcmp.eq.s32.totalorder %v714, 1
      %v717 = vsel %vm715, %v711, 0.0
      %v718 = vsel %vm716, %v712, 0.0
      %s719 = scalar_lea.vmem %s1, 56
      %v720 = vld [vmem:[%s719] sm:$0xff]
      %v722 = vsel %vm235, %v720, 0
      %v725 = vsel %vm239, %v717, 0
      %v728 = vsel %vm239, %v718, 0
      %730 = vmatpush.msra.mxu0 0.0
      %731 = vmatpush.msra.mxu0 0.0
      %732 = vmatpush.msra.mxu0 0.0
      %733 = vmatpush.msra.mxu0 0.0
      %734 = vmatpush.msra.mxu0 0.0
      %735 = vmatpush.msra.mxu0 0.0
      %736 = vmatpush.msra.mxu0 0.0
      %737 = vmatpush.msra.mxu0 0.0
      %738 = vmatpush.msra.mxu0 0.0
      %739 = vmatpush.msra.mxu0 0.0
      %740 = vmatpush.msra.mxu0 0.0
      %741 = vmatpush.msra.mxu0 0.0
      %742 = vmatpush.msra.mxu0 0.0
      %743 = vmatpush.msra.mxu0 0.0
      %744 = vmatpush.msra.mxu0 0.0
      %745 = vmatpush.msra.mxu0 %v725
      %746 = vmatmul.f32.gmra.mxu0 %v722
      %v747 = vpop.f32.mrf.mxu0
      %v748 = vadd.f32 0.0, %v747
      %749 = vdwg.mxu0
      %750 = vmatpush.msra.mxu0 0.0
      %751 = vmatpush.msra.mxu0 0.0
      %752 = vmatpush.msra.mxu0 0.0
      %753 = vmatpush.msra.mxu0 0.0
      %754 = vmatpush.msra.mxu0 0.0
      %755 = vmatpush.msra.mxu0 0.0
      %756 = vmatpush.msra.mxu0 0.0
      %757 = vmatpush.msra.mxu0 0.0
      %758 = vmatpush.msra.mxu0 0.0
      %759 = vmatpush.msra.mxu0 0.0
      %760 = vmatpush.msra.mxu0 0.0
      %761 = vmatpush.msra.mxu0 0.0
      %762 = vmatpush.msra.mxu0 0.0
      %763 = vmatpush.msra.mxu0 0.0
      %764 = vmatpush.msra.mxu0 0.0
      %765 = vmatpush.msra.mxu0 %v728
      %766 = vmatmul.f32.gmra.mxu0 %v722
      %v767 = vpop.f32.mrf.mxu0
      %v768 = vadd.f32 0.0, %v767
      %769 = vdwg.mxu0
      %v770 = vadd.f32 %v699, %v748
      %v771 = vadd.f32 %v700, %v768
      %772 = vst [vmem:[#allocation1] ss:$2 sm:$0xff] %v212
      %v773 = vld.sshfl [vmem:[#allocation1] sm:$0xff pattern:$0x75316420]
      %v774 = vld.sshfl [vmem:[#allocation1 + $0x8] sm:$0xff pattern:$0x75316420]
      %777 = vrot.lane.b32.xlu0 %v773, 111
      %v778 = vpop.permute.xlu0 %777
      %779 = vrot.lane.b32.xlu0 %v774, 111
      %v780 = vpop.permute.xlu0 %779
      %vm781 = vcmp.lt.s32.totalorder %v172, 111
      %v782 = vsel %vm781, %v778, %v780
      %v783 = vsel %vm781, %v780, %v778
      %vm784 = vmand %vm200, %vm204
      %vm785 = vmand %vm201, %vm205
      %v786 = vsel %vm784, 1, 0
      %v787 = vsel %vm785, 1, 0
      %vm788 = vcmp.eq.s32.totalorder %v786, 1
      %vm789 = vcmp.eq.s32.totalorder %v787, 1
      %v790 = vsel %vm788, %v782, 0.0
      %v791 = vsel %vm789, %v783, 0.0
      %s792 = scalar_lea.vmem %s1, 64
      %v793 = vld [vmem:[%s792] sm:$0xff]
      %v795 = vsel %vm235, %v793, 0
      %v798 = vsel %vm239, %v790, 0
      %v801 = vsel %vm239, %v791, 0
      %803 = vmatpush.msra.mxu0 0.0
      %804 = vmatpush.msra.mxu0 0.0
      %805 = vmatpush.msra.mxu0 0.0
      %806 = vmatpush.msra.mxu0 0.0
      %807 = vmatpush.msra.mxu0 0.0
      %808 = vmatpush.msra.mxu0 0.0
      %809 = vmatpush.msra.mxu0 0.0
      %810 = vmatpush.msra.mxu0 0.0
      %811 = vmatpush.msra.mxu0 0.0
      %812 = vmatpush.msra.mxu0 0.0
      %813 = vmatpush.msra.mxu0 0.0
      %814 = vmatpush.msra.mxu0 0.0
      %815 = vmatpush.msra.mxu0 0.0
      %816 = vmatpush.msra.mxu0 0.0
      %817 = vmatpush.msra.mxu0 0.0
      %818 = vmatpush.msra.mxu0 %v798
      %819 = vmatmul.f32.gmra.mxu0 %v795
      %v820 = vpop.f32.mrf.mxu0
      %v821 = vadd.f32 0.0, %v820
      %822 = vdwg.mxu0
      %823 = vmatpush.msra.mxu0 0.0
      %824 = vmatpush.msra.mxu0 0.0
      %825 = vmatpush.msra.mxu0 0.0
      %826 = vmatpush.msra.mxu0 0.0
      %827 = vmatpush.msra.mxu0 0.0
      %828 = vmatpush.msra.mxu0 0.0
      %829 = vmatpush.msra.mxu0 0.0
      %830 = vmatpush.msra.mxu0 0.0
      %831 = vmatpush.msra.mxu0 0.0
      %832 = vmatpush.msra.mxu0 0.0
      %833 = vmatpush.msra.mxu0 0.0
      %834 = vmatpush.msra.mxu0 0.0
      %835 = vmatpush.msra.mxu0 0.0
      %836 = vmatpush.msra.mxu0 0.0
      %837 = vmatpush.msra.mxu0 0.0
      %838 = vmatpush.msra.mxu0 %v801
      %839 = vmatmul.f32.gmra.mxu0 %v795
      %v840 = vpop.f32.mrf.mxu0
      %v841 = vadd.f32 0.0, %v840
      %842 = vdwg.mxu0
      %v843 = vadd.f32 %v770, %v821
      %v844 = vadd.f32 %v771, %v841
      %845 = vst [vmem:[#allocation1] ss:$2 sm:$0xff] %v212
      %v846 = vld.sshfl [vmem:[#allocation1] sm:$0xff pattern:$0x75316420]
      %v847 = vld.sshfl [vmem:[#allocation1 + $0x8] sm:$0xff pattern:$0x75316420]
      %850 = vst [vmem:[%s170] sm:$0xf] %v846
      %851 = vst [vmem:[%s170 + $0x8] sm:$0xf] %v847
      %v852 = vmax.f32 %v843, 0.0
      %v853 = vmax.f32 %v844, 0.0
      %v856 = vrot.slane %v852, 4
      %v857 = vrot.slane %v853, 4
      %860 = vst [vmem:[%s170] sm:$0xf0] %v856
      %861 = vst [vmem:[%s170 + $0x8] sm:$0xf0] %v857
      %862 = vst [vmem:[%s170 + $0x10] sm:$0xf] %v856
      %863 = vst [vmem:[%s170 + $0x18] sm:$0xf] %v857
      %p864 = scmp.lt.s32.totalorder %s14, 1
      %s865 = scalar_select %p864, %s14, 1
      %s866 = smul.addr %s865, 4
      %s867 = smul.addr %s866, 8
      %s868 = scalar_lea.vmem %s3, %s867
      // Predicated region
      $region33: #{tpu_custom_call.1} parent=31 // pred_check
        %p869 = pneg %p100
      $region34: #{tpu_custom_call.1} parent=31 // pred_check_branch
        %871 = sbr.rel (%p869) target = $region36
      $region35: #{tpu_custom_call.1} parent=31 // pred_region
        _
      $region36: #{tpu_custom_call.1} parent=31 // pred_fallthru
        _
    $region32: #{tpu_custom_call.1} parent=5 // pred_fallthru
      _
    %p872 = scmp.le.s32.totalorder 2, %s9
    // Predicated region
    $region37: #{tpu_custom_call.1} parent=5 // pred_check
      %p873 = pneg %p872
    $region38: #{tpu_custom_call.1} parent=5 // pred_check_branch
      %875 = sbr.rel (%p873) target = $region40
    $region39: #{tpu_custom_call.1} parent=5 // pred_region
      %s876 = ssub.s32 %s9, 2
      // Predicated region
      $region41: #{tpu_custom_call.1} parent=39 // pred_check
        %p877 = pneg %p106
      $region42: #{tpu_custom_call.1} parent=39 // pred_check_branch
        %879 = sbr.rel (%p877) target = $region44
      $region43: #{tpu_custom_call.1} parent=39 // pred_region
        %p880 = scmp.lt.s32.totalorder %s15, 1
        %s881 = scalar_select %p880, %s15, 1
        %s882 = smul.addr %s881, 4
        %s883 = smul.addr %s882, 8
        %s884 = scalar_lea.vmem %s3, %s883
      $region44: #{tpu_custom_call.1} parent=39 // pred_fallthru
        _
    $region40: #{tpu_custom_call.1} parent=5 // pred_fallthru
      _
  $region6: #{tpu_custom_call.1} parent=0 // loop_footer
    %s13 = sadd.s32 1, %s9
  $region7: #{tpu_custom_call.1} parent=0 // loop_footer_branch
    %8 = sbr.rel target = $region3
  $region8: #{tpu_custom_call.1} parent=0 // loop_exit
    _

</llo_original>
